<compile_context>
chip_gen: v7x
topology: tpu7x:2x2x1
jax: 0.10.0
libtpu: 0.0.40
codegen_flags: <defaults>
</compile_context>

<pallas_src>
import functools

import numpy as np

import jax
import jax.numpy as jnp
from jax.experimental import pallas as pl
from jax.experimental.pallas import tpu as pltpu

LANE = 128   # every packed feature dim is zero-padded to this many lanes


def _round_up(x, m):
    return (x + m - 1) // m * m


# ----------------------------------------------------------------------------
# Fused kernel: conv3x3 (3 banded MXU matmuls) + ReLU + global-avg-pool
# (folded into the FC weight) + FC + ReLU for BOTH inputs, then the
# similarity MLP (single K=256 matmul for the [e1, e2] concat).
# ----------------------------------------------------------------------------
def rnet_kernel(x1_ref, x2_ref, wconv_ref, bconv_ref, wfct_ref, bfc_ref,
                w1_ref, b1_ref, w2_ref, b2_ref, out_ref,
                *, h_img, n_cls, apply_softmax):
    bt = x1_ref.shape[0]
    wcp = x1_ref.shape[-1]                 # (W+2)*Cin padded to LANE
    lane = wconv_ref.shape[-1]
    n2 = 2 * bt

    # Both images of each pair as one (2*bt, Hp, 128) bf16 slab (tiny copy).
    x = jnp.concatenate([x1_ref[...], x2_ref[...]], axis=0)

    # ---- conv3x3(pad=1): 3 banded matmuls; output lanes = w*Cout + co.
    # (At bt<=32 the f32 conv temp is <2 MiB; chunk over H if bt is pushed
    #  far beyond that on 64 MiB-VMEM v7x.)
    acc = jnp.zeros((n2 * h_img, lane), jnp.float32)
    for kh in range(3):                                  # static unroll
        xk = x[:, kh:kh + h_img, :].reshape(n2 * h_img, wcp)
        acc += jnp.dot(xk, wconv_ref[kh], preferred_element_type=jnp.float32)
    z = jnp.maximum(acc + bconv_ref[...], 0.0)           # bias + ReLU (f32)

    # ---- global average pool + Linear(Cout->E) + ReLU.
    # Sum over H here; the sum over W and the 1/(H*W) factor are folded into
    # the tiled FC weight wfct.
    zs = z.reshape(n2, h_img, lane).sum(axis=1)          # (2*bt, 128) f32
    emb = jnp.dot(zs.astype(wfct_ref.dtype), wfct_ref[...],
                  preferred_element_type=jnp.float32)
    emb = jnp.maximum(emb + bfc_ref[...], 0.0)           # (2*bt, 128)

    # ---- similarity MLP: Linear(2E->H) as ONE K=256 matmul on [e1, e2].
    e = emb.astype(w1_ref.dtype)
    e12 = jnp.concatenate([e[:bt], e[bt:]], axis=-1)     # (bt, 256)
    hdn = jnp.dot(e12, w1_ref[...], preferred_element_type=jnp.float32)
    hdn = jnp.maximum(hdn + b1_ref[...], 0.0)
    out = jnp.dot(hdn.astype(w2_ref.dtype), w2_ref[...],
                  preferred_element_type=jnp.float32) + b2_ref[...]

    if apply_softmax:
        col = jax.lax.broadcasted_iota(jnp.int32, out.shape, 1)
        masked = jnp.where(col < n_cls, out, -1e30)      # ignore padded lanes
        m = jnp.max(masked, axis=-1, keepdims=True)
        ex = jnp.exp(masked - m)
        out = ex / jnp.sum(ex, axis=-1, keepdims=True)   # exact divide

    out_ref[...] = out.astype(out_ref.dtype)


# ----------------------------------------------------------------------------
# Parameter construction / lane-dense packing (padding is zeros => exact).
# ----------------------------------------------------------------------------
def init_params(key, cin=4, cout=8, emb=32, hidden=32, n_cls=2):
    ks = jax.random.split(key, 8)
    s = 0.1
    return {
        "wconv": s * jax.random.normal(ks[0], (3, 3, cin, cout), jnp.float32),
        "bconv": s * jax.random.normal(ks[1], (cout,), jnp.float32),
        "wfc":   s * jax.random.normal(ks[2], (cout, emb), jnp.float32),
        "bfc":   s * jax.random.normal(ks[3], (emb,), jnp.float32),
        # Linear(2E -> hidden) split into the e1-half and e2-half.
        "w1a":   s * jax.random.normal(ks[4], (emb, hidden), jnp.float32),
        "w1b":   s * jax.random.normal(ks[5], (emb, hidden), jnp.float32),
        "b1":    s * jax.random.normal(ks[6], (hidden,), jnp.float32),
        "w2":    s * jax.random.normal(ks[7], (hidden, n_cls), jnp.float32),
        "b2":    jnp.zeros((n_cls,), jnp.float32),
    }


def pack_params(p, h_img, w_img):
    """Pack weights for the in-kernel conv/pool folding; bf16 weights, f32 biases."""
    cin, cout = p["wconv"].shape[2], p["wconv"].shape[3]
    emb, hid = p["wfc"].shape[1], p["w1a"].shape[1]
    ncls = p["w2"].shape[1]
    assert (w_img + 2) * cin <= LANE and w_img * cout <= LANE
    assert emb <= LANE and hid <= LANE and ncls <= LANE

    wc = np.asarray(p["wconv"], np.float32)                 # (3,3,Cin,Cout)
    # Banded per-kh conv weight: rows = wp*Cin + c (wp over padded width),
    # cols = w*Cout + co; entry = wc[kh, wp-w, c, co] for wp-w in {0,1,2}.
    wconv3 = np.zeros((3, LANE, LANE), np.float32)
    for kh in range(3):
        for kw in range(3):
            for w in range(w_img):
                wp = w + kw
                wconv3[kh, wp * cin:(wp + 1) * cin,
                       w * cout:(w + 1) * cout] = wc[kh, kw]

    bconv_t = np.zeros((1, LANE), np.float32)
    bconv_t[0, :w_img * cout] = np.tile(np.asarray(p["bconv"], np.float32),
                                        w_img)

    # FC weight tiled over w, with the 1/(H*W) average-pool factor folded in.
    wfct = np.zeros((LANE, LANE), np.float32)
    wfc_hw = np.asarray(p["wfc"], np.float32) / float(h_img * w_img)
    for w in range(w_img):
        wfct[w * cout:(w + 1) * cout, :emb] = wfc_hw

    # Fused Linear(2E -> hidden): rows [0:E] act on e1, rows [128:128+E] on e2.
    w1cat = np.zeros((2 * LANE, LANE), np.float32)
    w1cat[:emb, :hid] = np.asarray(p["w1a"], np.float32)
    w1cat[LANE:LANE + emb, :hid] = np.asarray(p["w1b"], np.float32)

    w2p = np.zeros((LANE, LANE), np.float32)
    w2p[:hid, :ncls] = np.asarray(p["w2"], np.float32)

    def padb(b):
        out = np.zeros((1, LANE), np.float32)
        out[0, :b.shape[0]] = np.asarray(b, np.float32)
        return out

    return {
        "wconv3": jnp.asarray(wconv3, jnp.bfloat16),
        "bconv":  jnp.asarray(bconv_t, jnp.float32),
        "wfct":   jnp.asarray(wfct, jnp.bfloat16),
        "bfc":    jnp.asarray(padb(p["bfc"]), jnp.float32),
        "w1cat":  jnp.asarray(w1cat, jnp.bfloat16),
        "b1":     jnp.asarray(padb(p["b1"]), jnp.float32),
        "w2":     jnp.asarray(w2p, jnp.bfloat16),
        "b2":     jnp.asarray(padb(p["b2"]), jnp.float32),
    }


def _pack_input(x):
    """NCHW f32 -> spatially padded NHWC with W and C merged into the lane dim.

    Result: (B, Hp, LANE) bf16 with Hp = round_up(H+2, 8); lane = wp*C + c.
    Near-raw size (no 9x im2col expansion, no big lane padding of patches).
    """
    b, c, h, w = x.shape
    wc = (w + 2) * c
    assert wc <= LANE
    hp = _round_up(h + 2, 8)
    xh = jnp.transpose(x, (0, 2, 3, 1)).astype(jnp.bfloat16)        # NHWC
    xp = jnp.pad(xh, ((0, 0), (1, 1 + hp - (h + 2)), (1, 1), (0, 0)))
    xp = xp.reshape(b, hp, wc)
    return jnp.pad(xp, ((0, 0), (0, 0), (0, LANE - wc)))


def _pick_batch_tile(b):
    """Few, large grid steps (amortise ~0.35us/step; big DMAs), but keep >=2
    parallel steps when the batch allows so v7x's two TensorCores both work.
    Cap at 32 rows so the f32 conv temp stays well inside the scoped VMEM."""
    if b <= 8:
        return b
    bt = min(32, b // 2)
    while b % bt:
        bt -= 1
    return bt


# ----------------------------------------------------------------------------
# Fused forward: one pallas_call, grid over batch tiles (megacore-parallel).
# ----------------------------------------------------------------------------
@functools.partial(jax.jit, static_argnames=("n_cls", "logits", "batch_tile"))
def rnetwork_forward(packed, x1, x2, *, n_cls=2, logits=True, batch_tile=None):
    b, _, h_img, _ = x1.shape
    bt = _pick_batch_tile(b) if batch_tile is None else batch_tile
    assert b % bt == 0
    x1p = _pack_input(x1)
    x2p = _pack_input(x2)
    hp = x1p.shape[1]

    # VMEM sizing: what we actually need plus generous headroom, capped at the
    # default scoped limit (never the whole 64 MiB per-core VMEM of v7x).
    in_block = bt * hp * LANE * 2                       # one bf16 input block
    weights = 7 * LANE * LANE * 2 + 4 * LANE * 4        # bf16 weights + biases
    f32_tmp = 2 * bt * h_img * LANE * 4 * 3             # conv acc / relu / sums
    vmem_bytes = int(min(32 << 20,
                         4 * (4 * in_block + 2 * weights + f32_tmp) + (4 << 20)))

    const2 = lambda i: (0, 0)                           # weights: loaded once
    const3 = lambda i: (0, 0, 0)
    kern = functools.partial(rnet_kernel, h_img=h_img, n_cls=n_cls,
                             apply_softmax=not logits)
    out = pl.pallas_call(
        kern,
        out_shape=jax.ShapeDtypeStruct((b, LANE), jnp.float32),
        grid=(b // bt,),
        in_specs=[
            pl.BlockSpec((bt, hp, LANE), lambda i: (i, 0, 0)),   # x1 packed
            pl.BlockSpec((bt, hp, LANE), lambda i: (i, 0, 0)),   # x2 packed
            pl.BlockSpec((3, LANE, LANE), const3),               # conv (banded)
            pl.BlockSpec((1, LANE), const2),                     # conv bias
            pl.BlockSpec((LANE, LANE), const2),                  # fc (pool-folded)
            pl.BlockSpec((1, LANE), const2),                     # fc bias
            pl.BlockSpec((2 * LANE, LANE), const2),              # sim Linear(2E->H)
            pl.BlockSpec((1, LANE), const2),                     # b1
            pl.BlockSpec((LANE, LANE), const2),                  # sim Linear(H->n)
            pl.BlockSpec((1, LANE), const2),                     # b2
        ],
        out_specs=pl.BlockSpec((bt, LANE), lambda i: (i, 0)),    # lane-dense out
        compiler_params=pltpu.CompilerParams(
            dimension_semantics=("parallel",),
            vmem_limit_bytes=vmem_bytes,
        ),
    )(x1p, x2p, packed["wconv3"], packed["bconv"], packed["wfct"],
      packed["bfc"], packed["w1cat"], packed["b1"], packed["w2"], packed["b2"])
    return out[:, :n_cls]


# ----------------------------------------------------------------------------
# Pure-JAX reference (mimics the kernel's bf16 rounding points).
# ----------------------------------------------------------------------------
def rnetwork_reference(params, x1, x2, *, logits=True):
    f32 = jnp.float32
    bf = lambda a: a.astype(jnp.bfloat16).astype(f32)
    h_img, w_img = x1.shape[2], x1.shape[3]
    wc = bf(params["wconv"])                           # (3,3,Cin,Cout) == HWIO
    bc = params["bconv"].astype(f32)
    wfc_hw = bf(params["wfc"].astype(f32) / (h_img * w_img))
    bfc = params["bfc"].astype(f32)
    w1a, w1b = bf(params["w1a"]), bf(params["w1b"])
    b1 = params["b1"].astype(f32)
    w2, b2 = bf(params["w2"]), params["b2"].astype(f32)

    def embed(x):
        xh = bf(jnp.transpose(x, (0, 2, 3, 1)))        # NHWC, bf16-rounded
        conv = jax.lax.conv_general_dilated(
            xh, wc, (1, 1), "SAME",
            dimension_numbers=("NHWC", "HWIO", "NHWC"))
        z = jnp.maximum(conv + bc, 0.0)                # (B,H,W,Cout)
        zs = bf(jnp.sum(z, axis=1))                    # sum over H
        emb = jnp.einsum("bwc,ce->be", zs, wfc_hw)     # sums over W and Cout
        return jnp.maximum(emb + bfc, 0.0)

    e1, e2 = bf(embed(x1)), bf(embed(x2))
    hdn = jnp.maximum(e1 @ w1a + e2 @ w1b + b1, 0.0)
    out = bf(hdn) @ w2 + b2
    return jax.nn.softmax(out, axis=-1) if not logits else out


if __name__ == "__main__":
    key = jax.random.PRNGKey(0)
    kp, k1, k2 = jax.random.split(key, 3)

    B, C, H, W = 2, 4, 16, 16                          # small NCHW inputs
    N_CLS = 2
    params = init_params(kp, cin=C, n_cls=N_CLS)
    packed = pack_params(params, H, W)
    x1 = jax.random.normal(k1, (B, C, H, W), jnp.float32)
    x2 = jax.random.normal(k2, (B, C, H, W), jnp.float32)

    out_logits = rnetwork_forward(packed, x1, x2, n_cls=N_CLS, logits=True)
    out_probs = rnetwork_forward(packed, x1, x2, n_cls=N_CLS, logits=False)
    jax.block_until_ready((out_logits, out_probs))

    ref_logits = rnetwork_reference(params, x1, x2, logits=True)
    ref_probs = rnetwork_reference(params, x1, x2, logits=False)

    tol = 2e-3
    assert out_logits.shape == (B, N_CLS) and out_probs.shape == (B, N_CLS)
    assert bool(jnp.all(jnp.isfinite(out_logits)))
    assert float(jnp.max(jnp.abs(jnp.sum(out_probs, axis=-1) - 1.0))) < 1e-3
    assert float(jnp.max(jnp.abs(out_logits - ref_logits))) < tol
    assert float(jnp.max(jnp.abs(out_probs - ref_probs))) < tol

    # Also exercise the tiled path (batch 16 -> batch_tile 8 -> 2 parallel
    # grid steps, i.e. the v7x dual-TensorCore configuration).
    B2 = 16
    ky1, ky2 = jax.random.split(jax.random.PRNGKey(1))
    y1 = jax.random.normal(ky1, (B2, C, H, W), jnp.float32)
    y2 = jax.random.normal(ky2, (B2, C, H, W), jnp.float32)
    out2 = rnetwork_forward(packed, y1, y2, n_cls=N_CLS, logits=True)
    jax.block_until_ready(out2)
    ref2 = rnetwork_reference(params, y1, y2, logits=True)
    assert float(jnp.max(jnp.abs(out2 - ref2))) < tol

    print("KERNEL_OK")
</pallas_src>

<mosaic_0001>
module attributes {stable_mosaic.version = 11 : i64} {
  func.func @rnet_kernel(%arg0: i32, %arg1: memref<2x24x128xbf16, #tpu.memory_space<vmem>>, %arg2: memref<2x24x128xbf16, #tpu.memory_space<vmem>>, %arg3: memref<3x128x128xbf16, #tpu.memory_space<vmem>>, %arg4: memref<1x128xf32, #tpu.memory_space<vmem>>, %arg5: memref<128x128xbf16, #tpu.memory_space<vmem>>, %arg6: memref<1x128xf32, #tpu.memory_space<vmem>>, %arg7: memref<256x128xbf16, #tpu.memory_space<vmem>>, %arg8: memref<1x128xf32, #tpu.memory_space<vmem>>, %arg9: memref<128x128xbf16, #tpu.memory_space<vmem>>, %arg10: memref<1x128xf32, #tpu.memory_space<vmem>>, %arg11: memref<2x128xf32, #tpu.memory_space<vmem>>) attributes {dimension_semantics = [#tpu.dimension_semantics<parallel>], iteration_bounds = array<i64: 1>, scalar_prefetch = 0 : i64, scratch_operands = 0 : i64, tpu.core_type = #tpu.core_type<tc>, window_params = [{transform_indices = @transform_0, window_bounds = array<i64: 2, 24, 128>}, {transform_indices = @transform_1, window_bounds = array<i64: 2, 24, 128>}, {pipeline_mode = #tpu.pipeline_mode<synchronous>, transform_indices = @transform_2, window_bounds = array<i64: 3, 128, 128>}, {pipeline_mode = #tpu.pipeline_mode<synchronous>, transform_indices = @transform_3, window_bounds = array<i64: 1, 128>}, {pipeline_mode = #tpu.pipeline_mode<synchronous>, transform_indices = @transform_4, window_bounds = array<i64: 128, 128>}, {pipeline_mode = #tpu.pipeline_mode<synchronous>, transform_indices = @transform_5, window_bounds = array<i64: 1, 128>}, {pipeline_mode = #tpu.pipeline_mode<synchronous>, transform_indices = @transform_6, window_bounds = array<i64: 256, 128>}, {pipeline_mode = #tpu.pipeline_mode<synchronous>, transform_indices = @transform_7, window_bounds = array<i64: 1, 128>}, {pipeline_mode = #tpu.pipeline_mode<synchronous>, transform_indices = @transform_8, window_bounds = array<i64: 128, 128>}, {pipeline_mode = #tpu.pipeline_mode<synchronous>, transform_indices = @transform_9, window_bounds = array<i64: 1, 128>}, {transform_indices = @transform_10, window_bounds = array<i64: 2, 128>}]} {
    %c0 = arith.constant 0 : index
    %c0_0 = arith.constant 0 : index
    %c0_1 = arith.constant 0 : index
    %0 = vector.load %arg1[%c0, %c0_0, %c0_1] : memref<2x24x128xbf16, #tpu.memory_space<vmem>>, vector<2x24x128xbf16>
    %c0_2 = arith.constant 0 : index
    %c0_3 = arith.constant 0 : index
    %c0_4 = arith.constant 0 : index
    %1 = vector.load %arg2[%c0_2, %c0_3, %c0_4] : memref<2x24x128xbf16, #tpu.memory_space<vmem>>, vector<2x24x128xbf16>
    %2 = tpu.concatenate %0, %1 in 0 : vector<2x24x128xbf16>, vector<2x24x128xbf16> -> vector<4x24x128xbf16>
    %cst = arith.constant 0.000000e+00 : f32
    %3 = vector.broadcast %cst : f32 to vector<64x128xf32>
    %4 = vector.extract_strided_slice %2 {offsets = [0, 0, 0], sizes = [4, 16, 128], strides = [1, 1, 1]} : vector<4x24x128xbf16> to vector<4x16x128xbf16>
    %5 = vector.shape_cast %4 : vector<4x16x128xbf16> to vector<64x128xbf16>
    %c0_5 = arith.constant 0 : index
    %c0_6 = arith.constant 0 : index
    %c0_7 = arith.constant 0 : index
    %6 = vector.load %arg3[%c0_5, %c0_6, %c0_7] : memref<3x128x128xbf16, #tpu.memory_space<vmem>>, vector<1x128x128xbf16>
    %7 = vector.shape_cast %6 : vector<1x128x128xbf16> to vector<128x128xbf16>
    %cst_8 = arith.constant dense<0.000000e+00> : vector<64x128xf32>
    %8 = tpu.matmul %5, %7, %cst_8 {dimension_numbers = #tpu.dot_dimension_numbers<[1], [0], [0], [1], [0, 0, 1, 1], [], []>} : vector<64x128xbf16>, vector<128x128xbf16>, vector<64x128xf32> -> vector<64x128xf32>
    %9 = arith.addf %3, %8 : vector<64x128xf32>
    %10 = vector.extract_strided_slice %2 {offsets = [0, 1, 0], sizes = [4, 16, 128], strides = [1, 1, 1]} : vector<4x24x128xbf16> to vector<4x16x128xbf16>
    %11 = vector.shape_cast %10 : vector<4x16x128xbf16> to vector<64x128xbf16>
    %c1 = arith.constant 1 : index
    %c0_9 = arith.constant 0 : index
    %c0_10 = arith.constant 0 : index
    %12 = vector.load %arg3[%c1, %c0_9, %c0_10] : memref<3x128x128xbf16, #tpu.memory_space<vmem>>, vector<1x128x128xbf16>
    %13 = vector.shape_cast %12 : vector<1x128x128xbf16> to vector<128x128xbf16>
    %cst_11 = arith.constant dense<0.000000e+00> : vector<64x128xf32>
    %14 = tpu.matmul %11, %13, %cst_11 {dimension_numbers = #tpu.dot_dimension_numbers<[1], [0], [0], [1], [0, 0, 1, 1], [], []>} : vector<64x128xbf16>, vector<128x128xbf16>, vector<64x128xf32> -> vector<64x128xf32>
    %15 = arith.addf %9, %14 : vector<64x128xf32>
    %16 = vector.extract_strided_slice %2 {offsets = [0, 2, 0], sizes = [4, 16, 128], strides = [1, 1, 1]} : vector<4x24x128xbf16> to vector<4x16x128xbf16>
    %17 = vector.shape_cast %16 : vector<4x16x128xbf16> to vector<64x128xbf16>
    %c2 = arith.constant 2 : index
    %c0_12 = arith.constant 0 : index
    %c0_13 = arith.constant 0 : index
    %18 = vector.load %arg3[%c2, %c0_12, %c0_13] : memref<3x128x128xbf16, #tpu.memory_space<vmem>>, vector<1x128x128xbf16>
    %19 = vector.shape_cast %18 : vector<1x128x128xbf16> to vector<128x128xbf16>
    %cst_14 = arith.constant dense<0.000000e+00> : vector<64x128xf32>
    %20 = tpu.matmul %17, %19, %cst_14 {dimension_numbers = #tpu.dot_dimension_numbers<[1], [0], [0], [1], [0, 0, 1, 1], [], []>} : vector<64x128xbf16>, vector<128x128xbf16>, vector<64x128xf32> -> vector<64x128xf32>
    %21 = arith.addf %15, %20 : vector<64x128xf32>
    %c0_15 = arith.constant 0 : index
    %c0_16 = arith.constant 0 : index
    %22 = vector.load %arg4[%c0_15, %c0_16] : memref<1x128xf32, #tpu.memory_space<vmem>>, vector<1x128xf32>
    %23 = vector.broadcast %22 : vector<1x128xf32> to vector<64x128xf32>
    %24 = arith.addf %21, %23 : vector<64x128xf32>
    %cst_17 = arith.constant 0.000000e+00 : f32
    %25 = vector.broadcast %cst_17 : f32 to vector<64x128xf32>
    %26 = arith.maximumf %24, %25 : vector<64x128xf32>
    %27 = vector.shape_cast %26 : vector<64x128xf32> to vector<4x16x128xf32>
    %cst_18 = arith.constant dense<0.000000e+00> : vector<4x128xf32>
    %28 = vector.multi_reduction <add>, %27, %cst_18 [1] : vector<4x16x128xf32> to vector<4x128xf32>
    %29 = arith.truncf %28 : vector<4x128xf32> to vector<4x128xbf16>
    %c0_19 = arith.constant 0 : index
    %c0_20 = arith.constant 0 : index
    %30 = vector.load %arg5[%c0_19, %c0_20] : memref<128x128xbf16, #tpu.memory_space<vmem>>, vector<128x128xbf16>
    %cst_21 = arith.constant dense<0.000000e+00> : vector<4x128xf32>
    %31 = tpu.matmul %29, %30, %cst_21 {dimension_numbers = #tpu.dot_dimension_numbers<[1], [0], [0], [1], [0, 0, 1, 1], [], []>} : vector<4x128xbf16>, vector<128x128xbf16>, vector<4x128xf32> -> vector<4x128xf32>
    %c0_22 = arith.constant 0 : index
    %c0_23 = arith.constant 0 : index
    %32 = vector.load %arg6[%c0_22, %c0_23] : memref<1x128xf32, #tpu.memory_space<vmem>>, vector<1x128xf32>
    %33 = vector.broadcast %32 : vector<1x128xf32> to vector<4x128xf32>
    %34 = arith.addf %31, %33 : vector<4x128xf32>
    %cst_24 = arith.constant 0.000000e+00 : f32
    %35 = vector.broadcast %cst_24 : f32 to vector<4x128xf32>
    %36 = arith.maximumf %34, %35 : vector<4x128xf32>
    %37 = arith.truncf %36 : vector<4x128xf32> to vector<4x128xbf16>
    %38 = vector.extract_strided_slice %37 {offsets = [0, 0], sizes = [2, 128], strides = [1, 1]} : vector<4x128xbf16> to vector<2x128xbf16>
    %39 = vector.extract_strided_slice %37 {offsets = [2, 0], sizes = [2, 128], strides = [1, 1]} : vector<4x128xbf16> to vector<2x128xbf16>
    %40 = tpu.concatenate %38, %39 in 1 : vector<2x128xbf16>, vector<2x128xbf16> -> vector<2x256xbf16>
    %c0_25 = arith.constant 0 : index
    %c0_26 = arith.constant 0 : index
    %41 = vector.load %arg7[%c0_25, %c0_26] : memref<256x128xbf16, #tpu.memory_space<vmem>>, vector<256x128xbf16>
    %cst_27 = arith.constant dense<0.000000e+00> : vector<2x128xf32>
    %42 = tpu.matmul %40, %41, %cst_27 {dimension_numbers = #tpu.dot_dimension_numbers<[1], [0], [0], [1], [0, 0, 1, 1], [], []>} : vector<2x256xbf16>, vector<256x128xbf16>, vector<2x128xf32> -> vector<2x128xf32>
    %c0_28 = arith.constant 0 : index
    %c0_29 = arith.constant 0 : index
    %43 = vector.load %arg8[%c0_28, %c0_29] : memref<1x128xf32, #tpu.memory_space<vmem>>, vector<1x128xf32>
    %44 = vector.broadcast %43 : vector<1x128xf32> to vector<2x128xf32>
    %45 = arith.addf %42, %44 : vector<2x128xf32>
    %cst_30 = arith.constant 0.000000e+00 : f32
    %46 = vector.broadcast %cst_30 : f32 to vector<2x128xf32>
    %47 = arith.maximumf %45, %46 : vector<2x128xf32>
    %48 = arith.truncf %47 : vector<2x128xf32> to vector<2x128xbf16>
    %c0_31 = arith.constant 0 : index
    %c0_32 = arith.constant 0 : index
    %49 = vector.load %arg9[%c0_31, %c0_32] : memref<128x128xbf16, #tpu.memory_space<vmem>>, vector<128x128xbf16>
    %cst_33 = arith.constant dense<0.000000e+00> : vector<2x128xf32>
    %50 = tpu.matmul %48, %49, %cst_33 {dimension_numbers = #tpu.dot_dimension_numbers<[1], [0], [0], [1], [0, 0, 1, 1], [], []>} : vector<2x128xbf16>, vector<128x128xbf16>, vector<2x128xf32> -> vector<2x128xf32>
    %c0_34 = arith.constant 0 : index
    %c0_35 = arith.constant 0 : index
    %51 = vector.load %arg10[%c0_34, %c0_35] : memref<1x128xf32, #tpu.memory_space<vmem>>, vector<1x128xf32>
    %52 = vector.broadcast %51 : vector<1x128xf32> to vector<2x128xf32>
    %53 = arith.addf %50, %52 : vector<2x128xf32>
    %c0_36 = arith.constant 0 : index
    %c0_37 = arith.constant 0 : index
    %54 = vector.load %arg11[%c0_36, %c0_37] : memref<2x128xf32, #tpu.memory_space<vmem>>, vector<2x128xf32>
    tpu.vector_store %arg11[%c0_36, %c0_37], %53 {strides = array<i32>} : memref<2x128xf32, #tpu.memory_space<vmem>>, vector<2x128xf32>,
    return
  }
  func.func @transform_0(%arg0: i32) -> (i32, i32, i32) {
    %c0_i32 = arith.constant 0 : i32
    %c0_i32_0 = arith.constant 0 : i32
    %c0_i32_1 = arith.constant 0 : i32
    return %arg0, %c0_i32, %c0_i32_0 : i32, i32, i32
  }
  func.func @transform_1(%arg0: i32) -> (i32, i32, i32) {
    %c0_i32 = arith.constant 0 : i32
    %c0_i32_0 = arith.constant 0 : i32
    %c0_i32_1 = arith.constant 0 : i32
    return %arg0, %c0_i32, %c0_i32_0 : i32, i32, i32
  }
  func.func @transform_2(%arg0: i32) -> (i32, i32, i32) {
    %c0_i32 = arith.constant 0 : i32
    %c0_i32_0 = arith.constant 0 : i32
    %c0_i32_1 = arith.constant 0 : i32
    %c0_i32_2 = arith.constant 0 : i32
    return %c0_i32, %c0_i32_0, %c0_i32_1 : i32, i32, i32
  }
  func.func @transform_3(%arg0: i32) -> (i32, i32) {
    %c0_i32 = arith.constant 0 : i32
    %c0_i32_0 = arith.constant 0 : i32
    %c0_i32_1 = arith.constant 0 : i32
    return %c0_i32, %c0_i32_0 : i32, i32
  }
  func.func @transform_4(%arg0: i32) -> (i32, i32) {
    %c0_i32 = arith.constant 0 : i32
    %c0_i32_0 = arith.constant 0 : i32
    %c0_i32_1 = arith.constant 0 : i32
    return %c0_i32, %c0_i32_0 : i32, i32
  }
  func.func @transform_5(%arg0: i32) -> (i32, i32) {
    %c0_i32 = arith.constant 0 : i32
    %c0_i32_0 = arith.constant 0 : i32
    %c0_i32_1 = arith.constant 0 : i32
    return %c0_i32, %c0_i32_0 : i32, i32
  }
  func.func @transform_6(%arg0: i32) -> (i32, i32) {
    %c0_i32 = arith.constant 0 : i32
    %c0_i32_0 = arith.constant 0 : i32
    %c0_i32_1 = arith.constant 0 : i32
    return %c0_i32, %c0_i32_0 : i32, i32
  }
  func.func @transform_7(%arg0: i32) -> (i32, i32) {
    %c0_i32 = arith.constant 0 : i32
    %c0_i32_0 = arith.constant 0 : i32
    %c0_i32_1 = arith.constant 0 : i32
    return %c0_i32, %c0_i32_0 : i32, i32
  }
  func.func @transform_8(%arg0: i32) -> (i32, i32) {
    %c0_i32 = arith.constant 0 : i32
    %c0_i32_0 = arith.constant 0 : i32
    %c0_i32_1 = arith.constant 0 : i32
    return %c0_i32, %c0_i32_0 : i32, i32
  }
  func.func @transform_9(%arg0: i32) -> (i32, i32) {
    %c0_i32 = arith.constant 0 : i32
    %c0_i32_0 = arith.constant 0 : i32
    %c0_i32_1 = arith.constant 0 : i32
    return %c0_i32, %c0_i32_0 : i32, i32
  }
  func.func @transform_10(%arg0: i32) -> (i32, i32) {
    %c0_i32 = arith.constant 0 : i32
    %c0_i32_0 = arith.constant 0 : i32
    return %arg0, %c0_i32 : i32, i32
  }
}

</mosaic_0001>

<llo_original>
// kernel: rnetwork_forward.1
$region0: #{rnetwork_forward.1}
  #allocation0 [shape = 'u32[]', space=smem, size = 0x4, offset = 0x4, fixed_abs, tag = 'smem constant byte address 0x4 - core index']
  #allocation1 [shape = 'u32[144,128]{1,0:T(1,128)}', space=vmem, size = 0x12000, scoped, tag = 'internal scratch']
  %s0 = inlined_call_operand.vmem [shape: bf16[2,24,128], index: 0, kind: input, shape index: {}]
  %s1 = inlined_call_operand.vmem [shape: bf16[2,24,128], index: 1, kind: input, shape index: {}]
  %s2 = inlined_call_operand.vmem [shape: bf16[3,128,128], index: 2, kind: input, shape index: {}]
  %s3 = inlined_call_operand.vmem [shape: f32[1,128], index: 3, kind: input, shape index: {}]
  %s4 = inlined_call_operand.vmem [shape: bf16[128,128], index: 4, kind: input, shape index: {}]
  %s5 = inlined_call_operand.vmem [shape: f32[1,128], index: 5, kind: input, shape index: {}]
  %s6 = inlined_call_operand.vmem [shape: bf16[256,128], index: 6, kind: input, shape index: {}]
  %s7 = inlined_call_operand.vmem [shape: f32[1,128], index: 7, kind: input, shape index: {}]
  %s8 = inlined_call_operand.vmem [shape: bf16[128,128], index: 8, kind: input, shape index: {}]
  %s9 = inlined_call_operand.vmem [shape: f32[1,128], index: 9, kind: input, shape index: {}]
  %s10 = inlined_call_operand.hbm [shape: f32[2,128], index: 10, kind: output, shape index: {}]
  %s11 = sld [smem:[#allocation0]]
  $region50: #{rnetwork_forward.1} parent=0
    _
  %s13 = ssub.s32 1, %s11
  %s14 = scalar_select 0, %s13, %s11
  $region1: #{rnetwork_forward.1} parent=0
    #allocation2 [shape = 'u8[1024]{0}', space=vmem, size = 0x400, scoped, tag = 'output window, operand 0, single buffered']
    #allocation3 [shape = 's32[1]{0}', space=sflag, size = 0x4, scoped, tag = 'scoped memory for rnetwork_forward.1']
    %15 = vsyncpa [#allocation3], 0
    // Predicated region
    $region2: #{rnetwork_forward.1} parent=1 // pred_check
      _
    $region3: #{rnetwork_forward.1} parent=1 // pred_check_branch
      %17 = sbr.rel (0) target = $region5
    $region4: #{rnetwork_forward.1} parent=1 // pred_region
      _
    $region5: #{rnetwork_forward.1} parent=1 // pred_fallthru
      _
    // Predicated region
    $region6: #{rnetwork_forward.1} parent=1 // pred_check
      _
    $region7: #{rnetwork_forward.1} parent=1 // pred_check_branch
      %19 = sbr.rel (0) target = $region9
    $region8: #{rnetwork_forward.1} parent=1 // pred_region
      _
    $region9: #{rnetwork_forward.1} parent=1 // pred_fallthru
      _
    // Predicated region
    $region10: #{rnetwork_forward.1} parent=1 // pred_check
      _
    $region11: #{rnetwork_forward.1} parent=1 // pred_check_branch
      %21 = sbr.rel (0) target = $region13
    $region12: #{rnetwork_forward.1} parent=1 // pred_region
      _
    $region13: #{rnetwork_forward.1} parent=1 // pred_fallthru
      _
    // Predicated region
    $region14: #{rnetwork_forward.1} parent=1 // pred_check
      _
    $region15: #{rnetwork_forward.1} parent=1 // pred_check_branch
      %23 = sbr.rel (0) target = $region17
    $region16: #{rnetwork_forward.1} parent=1 // pred_region
      _
    $region17: #{rnetwork_forward.1} parent=1 // pred_fallthru
      _
    // Predicated region
    $region18: #{rnetwork_forward.1} parent=1 // pred_check
      _
    $region19: #{rnetwork_forward.1} parent=1 // pred_check_branch
      %25 = sbr.rel (0) target = $region21
    $region20: #{rnetwork_forward.1} parent=1 // pred_region
      _
    $region21: #{rnetwork_forward.1} parent=1 // pred_fallthru
      _
    // Predicated region
    $region22: #{rnetwork_forward.1} parent=1 // pred_check
      _
    $region23: #{rnetwork_forward.1} parent=1 // pred_check_branch
      %27 = sbr.rel (0) target = $region25
    $region24: #{rnetwork_forward.1} parent=1 // pred_region
      _
    $region25: #{rnetwork_forward.1} parent=1 // pred_fallthru
      _
    // Predicated region
    $region26: #{rnetwork_forward.1} parent=1 // pred_check
      _
    $region27: #{rnetwork_forward.1} parent=1 // pred_check_branch
      %29 = sbr.rel (0) target = $region29
    $region28: #{rnetwork_forward.1} parent=1 // pred_region
      _
    $region29: #{rnetwork_forward.1} parent=1 // pred_fallthru
      _
    // Predicated region
    $region30: #{rnetwork_forward.1} parent=1 // pred_check
      _
    $region31: #{rnetwork_forward.1} parent=1 // pred_check_branch
      %31 = sbr.rel (0) target = $region33
    $region32: #{rnetwork_forward.1} parent=1 // pred_region
      _
    $region33: #{rnetwork_forward.1} parent=1 // pred_fallthru
      _
    // Predicated region
    $region34: #{rnetwork_forward.1} parent=1 // pred_check
      _
    $region35: #{rnetwork_forward.1} parent=1 // pred_check_branch
      %33 = sbr.rel (0) target = $region37
    $region36: #{rnetwork_forward.1} parent=1 // pred_region
      _
    $region37: #{rnetwork_forward.1} parent=1 // pred_fallthru
      _
    // Predicated region
    $region38: #{rnetwork_forward.1} parent=1 // pred_check
      _
    $region39: #{rnetwork_forward.1} parent=1 // pred_check_branch
      %35 = sbr.rel (0) target = $region41
    $region40: #{rnetwork_forward.1} parent=1 // pred_region
      _
    $region41: #{rnetwork_forward.1} parent=1 // pred_fallthru
      _
    %v37 = vld [vmem:[%s0] sm:$0xf]
    %v38 = vld [vmem:[%s0 + $0x4] sm:$0xf]
    %v39 = vld [vmem:[%s0 + $0x8] sm:$0xf]
    %v40 = vld [vmem:[%s0 + $0xc] sm:$0xf]
    %v41 = vld [vmem:[%s0 + $0x10] sm:$0xf]
    %v42 = vld [vmem:[%s0 + $0x14] sm:$0xf]
    %v43 = vld [vmem:[%s1] sm:$0xf]
    %v44 = vld [vmem:[%s1 + $0x4] sm:$0xf]
    %v45 = vld [vmem:[%s1 + $0x8] sm:$0xf]
    %v46 = vld [vmem:[%s1 + $0xc] sm:$0xf]
    %v47 = vld [vmem:[%s1 + $0x10] sm:$0xf]
    %v48 = vld [vmem:[%s1 + $0x14] sm:$0xf]
    %v49 = vld [vmem:[%s2] sm:$0xf]
    %v50 = vld [vmem:[%s2 + $0x4] sm:$0xf]
    %v51 = vld [vmem:[%s2 + $0x8] sm:$0xf]
    %v52 = vld [vmem:[%s2 + $0xc] sm:$0xf]
    %v53 = vld [vmem:[%s2 + $0x10] sm:$0xf]
    %v54 = vld [vmem:[%s2 + $0x14] sm:$0xf]
    %v55 = vld [vmem:[%s2 + $0x18] sm:$0xf]
    %v56 = vld [vmem:[%s2 + $0x1c] sm:$0xf]
    %v57 = vld [vmem:[%s2 + $0x20] sm:$0xf]
    %v58 = vld [vmem:[%s2 + $0x24] sm:$0xf]
    %v59 = vld [vmem:[%s2 + $0x28] sm:$0xf]
    %v60 = vld [vmem:[%s2 + $0x2c] sm:$0xf]
    %v61 = vld [vmem:[%s2 + $0x30] sm:$0xf]
    %v62 = vld [vmem:[%s2 + $0x34] sm:$0xf]
    %v63 = vld [vmem:[%s2 + $0x38] sm:$0xf]
    %v64 = vld [vmem:[%s2 + $0x3c] sm:$0xf]
    %vm65 = vsmask.f32 3328
    %vm66 = vsmask.f32 7440
    %vm67 = vmor %vm65, %vm66
    %v69 = vshrl.u32 %v37, 16
    %v71 = vrot.slane %v69, 4
    %v72 = vshll.u32 %v37, 16
    %v74 = vrot.slane %v72, 5
    %v75 = vor.u32 %v71, %v74
    %v76 = vrot.slane %v75, 4
    %v78 = vshll.u32 %v38, 16
    %v80 = vrot.slane %v78, 5
    %v81 = vsel %vm67, %v76, %v80
    %v82 = vshrl.u32 %v38, 16
    %v84 = vrot.slane %v82, 4
    %v85 = vor.u32 %v84, %v80
    %v86 = vrot.slane %v85, 4
    %v88 = vshll.u32 %v39, 16
    %v90 = vrot.slane %v88, 5
    %v91 = vsel %vm67, %v86, %v90
    %v93 = vshrl.u32 %v40, 16
    %v95 = vrot.slane %v93, 4
    %v96 = vshll.u32 %v40, 16
    %v98 = vrot.slane %v96, 5
    %v99 = vor.u32 %v95, %v98
    %v100 = vrot.slane %v99, 4
    %v102 = vshll.u32 %v41, 16
    %v104 = vrot.slane %v102, 5
    %v105 = vsel %vm67, %v100, %v104
    %v106 = vshrl.u32 %v41, 16
    %v108 = vrot.slane %v106, 4
    %v109 = vor.u32 %v108, %v104
    %v110 = vrot.slane %v109, 4
    %v112 = vshll.u32 %v42, 16
    %v114 = vrot.slane %v112, 5
    %v115 = vsel %vm67, %v110, %v114
    %v117 = vshrl.u32 %v43, 16
    %v119 = vrot.slane %v117, 4
    %v120 = vshll.u32 %v43, 16
    %v122 = vrot.slane %v120, 5
    %v123 = vor.u32 %v119, %v122
    %v124 = vrot.slane %v123, 4
    %v126 = vshll.u32 %v44, 16
    %v128 = vrot.slane %v126, 5
    %v129 = vsel %vm67, %v124, %v128
    %v130 = vshrl.u32 %v44, 16
    %v132 = vrot.slane %v130, 4
    %v133 = vor.u32 %v132, %v128
    %v134 = vrot.slane %v133, 4
    %v136 = vshll.u32 %v45, 16
    %v138 = vrot.slane %v136, 5
    %v139 = vsel %vm67, %v134, %v138
    %v141 = vshrl.u32 %v46, 16
    %v143 = vrot.slane %v141, 4
    %v144 = vshll.u32 %v46, 16
    %v146 = vrot.slane %v144, 5
    %v147 = vor.u32 %v143, %v146
    %v148 = vrot.slane %v147, 4
    %v150 = vshll.u32 %v47, 16
    %v152 = vrot.slane %v150, 5
    %v153 = vsel %vm67, %v148, %v152
    %v154 = vshrl.u32 %v47, 16
    %v156 = vrot.slane %v154, 4
    %v157 = vor.u32 %v156, %v152
    %v158 = vrot.slane %v157, 4
    %v160 = vshll.u32 %v48, 16
    %v162 = vrot.slane %v160, 5
    %v163 = vsel %vm67, %v158, %v162
    %s164 = scalar_lea.vmem %s2, 64
    %v165 = vld [vmem:[%s164] sm:$0xf]
    %v166 = vld [vmem:[%s164 + $0x4] sm:$0xf]
    %v167 = vld [vmem:[%s164 + $0x8] sm:$0xf]
    %v168 = vld [vmem:[%s164 + $0xc] sm:$0xf]
    %v169 = vld [vmem:[%s164 + $0x10] sm:$0xf]
    %v170 = vld [vmem:[%s164 + $0x14] sm:$0xf]
    %v171 = vld [vmem:[%s164 + $0x18] sm:$0xf]
    %v172 = vld [vmem:[%s164 + $0x1c] sm:$0xf]
    %v173 = vld [vmem:[%s164 + $0x20] sm:$0xf]
    %v174 = vld [vmem:[%s164 + $0x24] sm:$0xf]
    %v175 = vld [vmem:[%s164 + $0x28] sm:$0xf]
    %v176 = vld [vmem:[%s164 + $0x2c] sm:$0xf]
    %v177 = vld [vmem:[%s164 + $0x30] sm:$0xf]
    %v178 = vld [vmem:[%s164 + $0x34] sm:$0xf]
    %v179 = vld [vmem:[%s164 + $0x38] sm:$0xf]
    %v180 = vld [vmem:[%s164 + $0x3c] sm:$0xf]
    %v181 = vunpack.c.l.b16 %v81
    %v182 = vunpack.c.l.b16 %v91
    %v183 = vunpack.c.l.b16 %v105
    %v184 = vunpack.c.l.b16 %v115
    %v185 = vunpack.c.l.b16 %v129
    %v186 = vunpack.c.l.b16 %v139
    %v187 = vunpack.c.l.b16 %v153
    %v188 = vunpack.c.l.b16 %v163
    %v189 = vpack.c.b16 %v182, %v181
    %v190 = vpack.c.b16 %v184, %v183
    %v191 = vpack.c.b16 %v186, %v185
    %v192 = vpack.c.b16 %v188, %v187
    %v213 = vunpack.c.l.b16 %v165
    %v214 = vunpack.c.l.b16 %v166
    %v215 = vunpack.c.l.b16 %v167
    %v216 = vunpack.c.l.b16 %v168
    %v217 = vunpack.c.l.b16 %v169
    %v218 = vunpack.c.l.b16 %v170
    %v219 = vunpack.c.l.b16 %v171
    %v220 = vunpack.c.l.b16 %v172
    %v221 = vunpack.c.l.b16 %v173
    %v222 = vunpack.c.l.b16 %v174
    %v223 = vunpack.c.l.b16 %v175
    %v224 = vunpack.c.l.b16 %v176
    %v225 = vunpack.c.l.b16 %v177
    %v226 = vunpack.c.l.b16 %v178
    %v227 = vunpack.c.l.b16 %v179
    %v228 = vunpack.c.l.b16 %v180
    %v229 = vpack.c.b16 %v214, %v213
    %v230 = vpack.c.b16 %v216, %v215
    %v231 = vpack.c.b16 %v218, %v217
    %v232 = vpack.c.b16 %v220, %v219
    %v233 = vpack.c.b16 %v222, %v221
    %v234 = vpack.c.b16 %v224, %v223
    %v235 = vpack.c.b16 %v226, %v225
    %v236 = vpack.c.b16 %v228, %v227
    %245 = vmatprep.subr.bf16.mxu0 0
    %246 = vmatpush1.bf16.msra.mxu0 %v229
    %247 = vmatprep.subr.bf16.mxu0 0
    %248 = vmatpush1.bf16.msra.mxu0 %v230
    %249 = vmatprep.subr.bf16.mxu0 0
    %250 = vmatpush1.bf16.msra.mxu0 %v231
    %251 = vmatprep.subr.bf16.mxu0 0
    %252 = vmatpush1.bf16.msra.mxu0 %v232
    %253 = vmatprep.subr.bf16.mxu0 0
    %254 = vmatpush1.bf16.msra.mxu0 %v233
    %255 = vmatprep.subr.bf16.mxu0 0
    %256 = vmatpush1.bf16.msra.mxu0 %v234
    %257 = vmatprep.subr.bf16.mxu0 0
    %258 = vmatpush1.bf16.msra.mxu0 %v235
    %259 = vmatprep.subr.bf16.mxu0 0
    %260 = vmatpush1.bf16.msra.mxu0 %v236
    %261 = vmatprep.subr.bf16.mxu0 0
    %262 = vmatpush1.bf16.msra.mxu0 0
    %263 = vmatprep.subr.bf16.mxu0 0
    %264 = vmatpush1.bf16.msra.mxu0 0
    %265 = vmatprep.subr.bf16.mxu0 0
    %266 = vmatpush1.bf16.msra.mxu0 0
    %267 = vmatprep.subr.bf16.mxu0 0
    %268 = vmatpush1.bf16.msra.mxu0 0
    %269 = vmatprep.subr.bf16.mxu0 0
    %270 = vmatpush1.bf16.msra.mxu0 0
    %271 = vmatprep.subr.bf16.mxu0 0
    %272 = vmatpush1.bf16.msra.mxu0 0
    %273 = vmatprep.subr.bf16.mxu0 0
    %274 = vmatpush1.bf16.msra.mxu0 0
    %275 = vmatprep.subr.bf16.mxu0 0
    %276 = vmatpush1.bf16.msra.mxu0 0
    %277 = vmatprep.mubr.bf16.mxu0 0
    %278 = vmatmul.mubr.bf16.gmra.mrb[0].mxu0 %v189
    %v279 = vpop.f32.mrb[0].mxu0
    %v280 = vadd.f32 0.0, %v279
    %v281 = vpop.f32.mrb[0].mxu0
    %v282 = vpop.f32.mrb[0].mxu0
    %v283 = vadd.f32 0.0, %v282
    %v284 = vpop.f32.mrb[0].mxu0
    %285 = vmatprep.mubr.bf16.mxu0 0
    %286 = vmatmul.mubr.bf16.gmra.mrb[0].mxu0 %v190
    %v287 = vpop.f32.mrb[0].mxu0
    %v288 = vadd.f32 0.0, %v287
    %v289 = vpop.f32.mrb[0].mxu0
    %v290 = vpop.f32.mrb[0].mxu0
    %v291 = vadd.f32 0.0, %v290
    %v292 = vpop.f32.mrb[0].mxu0
    %293 = vmatprep.mubr.bf16.mxu0 0
    %294 = vmatmul.mubr.bf16.gmra.mrb[0].mxu0 %v191
    %v295 = vpop.f32.mrb[0].mxu0
    %v296 = vadd.f32 0.0, %v295
    %v297 = vpop.f32.mrb[0].mxu0
    %v298 = vpop.f32.mrb[0].mxu0
    %v299 = vadd.f32 0.0, %v298
    %v300 = vpop.f32.mrb[0].mxu0
    %301 = vmatprep.mubr.bf16.mxu0 0
    %302 = vmatmul.mubr.bf16.gmra.mrb[0].mxu0 %v192
    %v303 = vpop.f32.mrb[0].mxu0
    %v304 = vadd.f32 0.0, %v303
    %v305 = vpop.f32.mrb[0].mxu0
    %v306 = vpop.f32.mrb[0].mxu0
    %v307 = vadd.f32 0.0, %v306
    %v308 = vpop.f32.mrb[0].mxu0
    %309 = vdwg.mxu0
    %v318 = vunpack.c.l.b16 %v37
    %v319 = vunpack.c.l.b16 %v38
    %v320 = vunpack.c.l.b16 %v40
    %v321 = vunpack.c.l.b16 %v41
    %v322 = vunpack.c.l.b16 %v43
    %v323 = vunpack.c.l.b16 %v44
    %v324 = vunpack.c.l.b16 %v46
    %v325 = vunpack.c.l.b16 %v47
    %v326 = vpack.c.b16 %v319, %v318
    %v327 = vpack.c.b16 %v321, %v320
    %v328 = vpack.c.b16 %v323, %v322
    %v329 = vpack.c.b16 %v325, %v324
    %v350 = vunpack.c.l.b16 %v49
    %v351 = vunpack.c.l.b16 %v50
    %v352 = vunpack.c.l.b16 %v51
    %v353 = vunpack.c.l.b16 %v52
    %v354 = vunpack.c.l.b16 %v53
    %v355 = vunpack.c.l.b16 %v54
    %v356 = vunpack.c.l.b16 %v55
    %v357 = vunpack.c.l.b16 %v56
    %v358 = vunpack.c.l.b16 %v57
    %v359 = vunpack.c.l.b16 %v58
    %v360 = vunpack.c.l.b16 %v59
    %v361 = vunpack.c.l.b16 %v60
    %v362 = vunpack.c.l.b16 %v61
    %v363 = vunpack.c.l.b16 %v62
    %v364 = vunpack.c.l.b16 %v63
    %v365 = vunpack.c.l.b16 %v64
    %v366 = vpack.c.b16 %v351, %v350
    %v367 = vpack.c.b16 %v353, %v352
    %v368 = vpack.c.b16 %v355, %v354
    %v369 = vpack.c.b16 %v357, %v356
    %v370 = vpack.c.b16 %v359, %v358
    %v371 = vpack.c.b16 %v361, %v360
    %v372 = vpack.c.b16 %v363, %v362
    %v373 = vpack.c.b16 %v365, %v364
    %382 = vmatprep.subr.bf16.mxu0 0
    %383 = vmatpush1.bf16.msra.mxu0 %v366
    %384 = vmatprep.subr.bf16.mxu0 0
    %385 = vmatpush1.bf16.msra.mxu0 %v367
    %386 = vmatprep.subr.bf16.mxu0 0
    %387 = vmatpush1.bf16.msra.mxu0 %v368
    %388 = vmatprep.subr.bf16.mxu0 0
    %389 = vmatpush1.bf16.msra.mxu0 %v369
    %390 = vmatprep.subr.bf16.mxu0 0
    %391 = vmatpush1.bf16.msra.mxu0 %v370
    %392 = vmatprep.subr.bf16.mxu0 0
    %393 = vmatpush1.bf16.msra.mxu0 %v371
    %394 = vmatprep.subr.bf16.mxu0 0
    %395 = vmatpush1.bf16.msra.mxu0 %v372
    %396 = vmatprep.subr.bf16.mxu0 0
    %397 = vmatpush1.bf16.msra.mxu0 %v373
    %398 = vmatprep.subr.bf16.mxu0 0
    %399 = vmatpush1.bf16.msra.mxu0 0
    %400 = vmatprep.subr.bf16.mxu0 0
    %401 = vmatpush1.bf16.msra.mxu0 0
    %402 = vmatprep.subr.bf16.mxu0 0
    %403 = vmatpush1.bf16.msra.mxu0 0
    %404 = vmatprep.subr.bf16.mxu0 0
    %405 = vmatpush1.bf16.msra.mxu0 0
    %406 = vmatprep.subr.bf16.mxu0 0
    %407 = vmatpush1.bf16.msra.mxu0 0
    %408 = vmatprep.subr.bf16.mxu0 0
    %409 = vmatpush1.bf16.msra.mxu0 0
    %410 = vmatprep.subr.bf16.mxu0 0
    %411 = vmatpush1.bf16.msra.mxu0 0
    %412 = vmatprep.subr.bf16.mxu0 0
    %413 = vmatpush1.bf16.msra.mxu0 0
    %414 = vmatprep.mubr.bf16.mxu0 0
    %415 = vmatmul.mubr.bf16.gmra.mrb[0].mxu0 %v326
    %v416 = vpop.f32.mrb[0].mxu0
    %v417 = vadd.f32 %v280, %v416
    %v418 = vpop.f32.mrb[0].mxu0
    %v419 = vpop.f32.mrb[0].mxu0
    %v420 = vadd.f32 %v283, %v419
    %v421 = vpop.f32.mrb[0].mxu0
    %422 = vmatprep.mubr.bf16.mxu0 0
    %423 = vmatmul.mubr.bf16.gmra.mrb[0].mxu0 %v327
    %v424 = vpop.f32.mrb[0].mxu0
    %v425 = vadd.f32 %v288, %v424
    %v426 = vpop.f32.mrb[0].mxu0
    %v427 = vpop.f32.mrb[0].mxu0
    %v428 = vadd.f32 %v291, %v427
    %v429 = vpop.f32.mrb[0].mxu0
    %430 = vmatprep.mubr.bf16.mxu0 0
    %431 = vmatmul.mubr.bf16.gmra.mrb[0].mxu0 %v328
    %v432 = vpop.f32.mrb[0].mxu0
    %v433 = vadd.f32 %v296, %v432
    %v434 = vpop.f32.mrb[0].mxu0
    %v435 = vpop.f32.mrb[0].mxu0
    %v436 = vadd.f32 %v299, %v435
    %v437 = vpop.f32.mrb[0].mxu0
    %438 = vmatprep.mubr.bf16.mxu0 0
    %439 = vmatmul.mubr.bf16.gmra.mrb[0].mxu0 %v329
    %v440 = vpop.f32.mrb[0].mxu0
    %v441 = vadd.f32 %v304, %v440
    %v442 = vpop.f32.mrb[0].mxu0
    %v443 = vpop.f32.mrb[0].mxu0
    %v444 = vadd.f32 %v307, %v443
    %v445 = vpop.f32.mrb[0].mxu0
    %446 = vdwg.mxu0
    %vm451 = vcmask 1042432
    %vm452 = vcmask 1046532
    %vm453 = vmor %vm451, %vm452
    %v454 = vrot.slane %v37, 5
    %v455 = vrot.slane %v454, 4
    %v456 = vrot.slane %v38, 5
    %v457 = vsel %vm453, %v455, %v456
    %v458 = vrot.slane %v456, 4
    %v459 = vrot.slane %v39, 5
    %v460 = vsel %vm453, %v458, %v459
    %v461 = vrot.slane %v40, 5
    %v462 = vrot.slane %v461, 4
    %v463 = vrot.slane %v41, 5
    %v464 = vsel %vm453, %v462, %v463
    %v465 = vrot.slane %v463, 4
    %v466 = vrot.slane %v42, 5
    %v467 = vsel %vm453, %v465, %v466
    %v468 = vrot.slane %v43, 5
    %v469 = vrot.slane %v468, 4
    %v470 = vrot.slane %v44, 5
    %v471 = vsel %vm453, %v469, %v470
    %v472 = vrot.slane %v470, 4
    %v473 = vrot.slane %v45, 5
    %v474 = vsel %vm453, %v472, %v473
    %v475 = vrot.slane %v46, 5
    %v476 = vrot.slane %v475, 4
    %v477 = vrot.slane %v47, 5
    %v478 = vsel %vm453, %v476, %v477
    %v479 = vrot.slane %v477, 4
    %v480 = vrot.slane %v48, 5
    %v481 = vsel %vm453, %v479, %v480
    %s482 = scalar_lea.vmem %s2, 128
    %v483 = vld [vmem:[%s482] sm:$0xf]
    %v484 = vld [vmem:[%s482 + $0x4] sm:$0xf]
    %v485 = vld [vmem:[%s482 + $0x8] sm:$0xf]
    %v486 = vld [vmem:[%s482 + $0xc] sm:$0xf]
    %v487 = vld [vmem:[%s482 + $0x10] sm:$0xf]
    %v488 = vld [vmem:[%s482 + $0x14] sm:$0xf]
    %v489 = vld [vmem:[%s482 + $0x18] sm:$0xf]
    %v490 = vld [vmem:[%s482 + $0x1c] sm:$0xf]
    %v491 = vld [vmem:[%s482 + $0x20] sm:$0xf]
    %v492 = vld [vmem:[%s482 + $0x24] sm:$0xf]
    %v493 = vld [vmem:[%s482 + $0x28] sm:$0xf]
    %v494 = vld [vmem:[%s482 + $0x2c] sm:$0xf]
    %v495 = vld [vmem:[%s482 + $0x30] sm:$0xf]
    %v496 = vld [vmem:[%s482 + $0x34] sm:$0xf]
    %v497 = vld [vmem:[%s482 + $0x38] sm:$0xf]
    %v498 = vld [vmem:[%s482 + $0x3c] sm:$0xf]
    %v499 = vunpack.c.l.b16 %v457
    %v500 = vunpack.c.l.b16 %v460
    %v501 = vunpack.c.l.b16 %v464
    %v502 = vunpack.c.l.b16 %v467
    %v503 = vunpack.c.l.b16 %v471
    %v504 = vunpack.c.l.b16 %v474
    %v505 = vunpack.c.l.b16 %v478
    %v506 = vunpack.c.l.b16 %v481
    %v507 = vpack.c.b16 %v500, %v499
    %v508 = vpack.c.b16 %v502, %v501
    %v509 = vpack.c.b16 %v504, %v503
    %v510 = vpack.c.b16 %v506, %v505
    %v531 = vunpack.c.l.b16 %v483
    %v532 = vunpack.c.l.b16 %v484
    %v533 = vunpack.c.l.b16 %v485
    %v534 = vunpack.c.l.b16 %v486
    %v535 = vunpack.c.l.b16 %v487
    %v536 = vunpack.c.l.b16 %v488
    %v537 = vunpack.c.l.b16 %v489
    %v538 = vunpack.c.l.b16 %v490
    %v539 = vunpack.c.l.b16 %v491
    %v540 = vunpack.c.l.b16 %v492
    %v541 = vunpack.c.l.b16 %v493
    %v542 = vunpack.c.l.b16 %v494
    %v543 = vunpack.c.l.b16 %v495
    %v544 = vunpack.c.l.b16 %v496
    %v545 = vunpack.c.l.b16 %v497
    %v546 = vunpack.c.l.b16 %v498
    %v547 = vpack.c.b16 %v532, %v531
    %v548 = vpack.c.b16 %v534, %v533
    %v549 = vpack.c.b16 %v536, %v535
    %v550 = vpack.c.b16 %v538, %v537
    %v551 = vpack.c.b16 %v540, %v539
    %v552 = vpack.c.b16 %v542, %v541
    %v553 = vpack.c.b16 %v544, %v543
    %v554 = vpack.c.b16 %v546, %v545
    %563 = vmatprep.subr.bf16.mxu0 0
    %564 = vmatpush1.bf16.msra.mxu0 %v547
    %565 = vmatprep.subr.bf16.mxu0 0
    %566 = vmatpush1.bf16.msra.mxu0 %v548
    %567 = vmatprep.subr.bf16.mxu0 0
    %568 = vmatpush1.bf16.msra.mxu0 %v549
    %569 = vmatprep.subr.bf16.mxu0 0
    %570 = vmatpush1.bf16.msra.mxu0 %v550
    %571 = vmatprep.subr.bf16.mxu0 0
    %572 = vmatpush1.bf16.msra.mxu0 %v551
    %573 = vmatprep.subr.bf16.mxu0 0
    %574 = vmatpush1.bf16.msra.mxu0 %v552
    %575 = vmatprep.subr.bf16.mxu0 0
    %576 = vmatpush1.bf16.msra.mxu0 %v553
    %577 = vmatprep.subr.bf16.mxu0 0
    %578 = vmatpush1.bf16.msra.mxu0 %v554
    %579 = vmatprep.subr.bf16.mxu0 0
    %580 = vmatpush1.bf16.msra.mxu0 0
    %581 = vmatprep.subr.bf16.mxu0 0
    %582 = vmatpush1.bf16.msra.mxu0 0
    %583 = vmatprep.subr.bf16.mxu0 0
    %584 = vmatpush1.bf16.msra.mxu0 0
    %585 = vmatprep.subr.bf16.mxu0 0
    %586 = vmatpush1.bf16.msra.mxu0 0
    %587 = vmatprep.subr.bf16.mxu0 0
    %588 = vmatpush1.bf16.msra.mxu0 0
    %589 = vmatprep.subr.bf16.mxu0 0
    %590 = vmatpush1.bf16.msra.mxu0 0
    %591 = vmatprep.subr.bf16.mxu0 0
    %592 = vmatpush1.bf16.msra.mxu0 0
    %593 = vmatprep.subr.bf16.mxu0 0
    %594 = vmatpush1.bf16.msra.mxu0 0
    %595 = vmatprep.mubr.bf16.mxu0 0
    %596 = vmatmul.mubr.bf16.gmra.mrb[0].mxu0 %v507
    %v597 = vpop.f32.mrb[0].mxu0
    %v598 = vadd.f32 0.0, %v597
    %v599 = vpop.f32.mrb[0].mxu0
    %v600 = vpop.f32.mrb[0].mxu0
    %v601 = vadd.f32 0.0, %v600
    %v602 = vpop.f32.mrb[0].mxu0
    %603 = vmatprep.mubr.bf16.mxu0 0
    %604 = vmatmul.mubr.bf16.gmra.mrb[0].mxu0 %v508
    %v605 = vpop.f32.mrb[0].mxu0
    %v606 = vadd.f32 0.0, %v605
    %v607 = vpop.f32.mrb[0].mxu0
    %v608 = vpop.f32.mrb[0].mxu0
    %v609 = vadd.f32 0.0, %v608
    %v610 = vpop.f32.mrb[0].mxu0
    %611 = vmatprep.mubr.bf16.mxu0 0
    %612 = vmatmul.mubr.bf16.gmra.mrb[0].mxu0 %v509
    %v613 = vpop.f32.mrb[0].mxu0
    %v614 = vadd.f32 0.0, %v613
    %v615 = vpop.f32.mrb[0].mxu0
    %v616 = vpop.f32.mrb[0].mxu0
    %v617 = vadd.f32 0.0, %v616
    %v618 = vpop.f32.mrb[0].mxu0
    %619 = vmatprep.mubr.bf16.mxu0 0
    %620 = vmatmul.mubr.bf16.gmra.mrb[0].mxu0 %v510
    %v621 = vpop.f32.mrb[0].mxu0
    %v622 = vadd.f32 0.0, %v621
    %v623 = vpop.f32.mrb[0].mxu0
    %v624 = vpop.f32.mrb[0].mxu0
    %v625 = vadd.f32 0.0, %v624
    %v626 = vpop.f32.mrb[0].mxu0
    %627 = vdwg.mxu0
    %v628 = vadd.f32 %v417, %v598
    %v629 = vadd.f32 %v420, %v601
    %v630 = vadd.f32 %v425, %v606
    %v631 = vadd.f32 %v428, %v609
    %v632 = vadd.f32 %v433, %v614
    %v633 = vadd.f32 %v436, %v617
    %v634 = vadd.f32 %v441, %v622
    %v635 = vadd.f32 %v444, %v625
    %v636 = vld [vmem:[%s3] sm:$0x1]
    %v638 = vlaneseq
    %v639 = vshrl.u32 %v638, 7
    %v640 = vsub.s32 0, %v639
    %v641 = vrot.slane %v636, %v640
    %v643 = vadd.f32 %v628, %v641
    %v644 = vadd.f32 %v629, %v641
    %v645 = vadd.f32 %v630, %v641
    %v646 = vadd.f32 %v631, %v641
    %v647 = vadd.f32 %v632, %v641
    %v648 = vadd.f32 %v633, %v641
    %v649 = vadd.f32 %v634, %v641
    %v650 = vadd.f32 %v635, %v641
    %v651 = vmax.f32 %v643, 0.0
    %v652 = vmax.f32 %v644, 0.0
    %v653 = vmax.f32 %v645, 0.0
    %v654 = vmax.f32 %v646, 0.0
    %v655 = vmax.f32 %v647, 0.0
    %v656 = vmax.f32 %v648, 0.0
    %v657 = vmax.f32 %v649, 0.0
    %v658 = vmax.f32 %v650, 0.0
    %v659 = vadd.f32 %v651, %v652
    %v660 = vrot.slane %v659, 4
    %v661 = vadd.f32 %v659, %v660
    %v662 = vrot.slane %v661, 2
    %v663 = vadd.f32 %v661, %v662
    %v664 = vrot.slane %v663, 1
    %v665 = vadd.f32 %v663, %v664
    %v666 = vadd.f32 %v653, %v654
    %v667 = vrot.slane %v666, 4
    %v668 = vadd.f32 %v666, %v667
    %v669 = vrot.slane %v668, 2
    %v670 = vadd.f32 %v668, %v669
    %v671 = vrot.slane %v670, 1
    %v672 = vadd.f32 %v670, %v671
    %v673 = vadd.f32 %v655, %v656
    %v674 = vrot.slane %v673, 4
    %v675 = vadd.f32 %v673, %v674
    %v676 = vrot.slane %v675, 2
    %v677 = vadd.f32 %v675, %v676
    %v678 = vrot.slane %v677, 1
    %v679 = vadd.f32 %v677, %v678
    %v680 = vadd.f32 %v657, %v658
    %v681 = vrot.slane %v680, 4
    %v682 = vadd.f32 %v680, %v681
    %v683 = vrot.slane %v682, 2
    %v684 = vadd.f32 %v682, %v683
    %v685 = vrot.slane %v684, 1
    %v686 = vadd.f32 %v684, %v685
    %v687 = vpack.c.bf16 %v665, %v665
    %v688 = vpack.c.bf16 %v672, %v672
    %v689 = vpack.c.bf16 %v679, %v679
    %v690 = vpack.c.bf16 %v686, %v686
    %v691 = vld [vmem:[%s4] sm:$0xf]
    %v692 = vld [vmem:[%s4 + $0x4] sm:$0xf]
    %v693 = vld [vmem:[%s4 + $0x8] sm:$0xf]
    %v694 = vld [vmem:[%s4 + $0xc] sm:$0xf]
    %v695 = vld [vmem:[%s4 + $0x10] sm:$0xf]
    %v696 = vld [vmem:[%s4 + $0x14] sm:$0xf]
    %v697 = vld [vmem:[%s4 + $0x18] sm:$0xf]
    %v698 = vld [vmem:[%s4 + $0x1c] sm:$0xf]
    %v699 = vld [vmem:[%s4 + $0x20] sm:$0xf]
    %v700 = vld [vmem:[%s4 + $0x24] sm:$0xf]
    %v701 = vld [vmem:[%s4 + $0x28] sm:$0xf]
    %v702 = vld [vmem:[%s4 + $0x2c] sm:$0xf]
    %v703 = vld [vmem:[%s4 + $0x30] sm:$0xf]
    %v704 = vld [vmem:[%s4 + $0x34] sm:$0xf]
    %v705 = vld [vmem:[%s4 + $0x38] sm:$0xf]
    %v706 = vld [vmem:[%s4 + $0x3c] sm:$0xf]
    %v707 = vld [vmem:[%s5] sm:$0x1]
    %v709 = vlaneseq
    %v710 = vshrl.u32 %v709, 7
    %v711 = vsub.s32 0, %v710
    %v712 = vrot.slane %v707, %v711
    %v718 = vunpack.c.l.b16 %v687
    %v719 = vunpack.c.l.b16 %v688
    %v720 = vunpack.c.l.b16 %v689
    %v721 = vunpack.c.l.b16 %v690
    %vm722 = vcmask 1041409
    %v723 = vsel %vm722, %v719, %v718
    %vm724 = vcmask 1042434
    %v725 = vsel %vm724, %v720, %v723
    %vm726 = vcmask 1043459
    %v727 = vsel %vm726, %v721, %v725
    %v728 = vpack.c.b16 %v727, %v727
    %v746 = vunpack.c.l.b16 %v691
    %v747 = vunpack.c.l.b16 %v692
    %v748 = vunpack.c.l.b16 %v693
    %v749 = vunpack.c.l.b16 %v694
    %v750 = vunpack.c.l.b16 %v695
    %v751 = vunpack.c.l.b16 %v696
    %v752 = vunpack.c.l.b16 %v697
    %v753 = vunpack.c.l.b16 %v698
    %v754 = vunpack.c.l.b16 %v699
    %v755 = vunpack.c.l.b16 %v700
    %v756 = vunpack.c.l.b16 %v701
    %v757 = vunpack.c.l.b16 %v702
    %v758 = vunpack.c.l.b16 %v703
    %v759 = vunpack.c.l.b16 %v704
    %v760 = vunpack.c.l.b16 %v705
    %v761 = vunpack.c.l.b16 %v706
    %v762 = vpack.c.b16 %v747, %v746
    %v763 = vpack.c.b16 %v749, %v748
    %v764 = vpack.c.b16 %v751, %v750
    %v765 = vpack.c.b16 %v753, %v752
    %v766 = vpack.c.b16 %v755, %v754
    %v767 = vpack.c.b16 %v757, %v756
    %v768 = vpack.c.b16 %v759, %v758
    %v769 = vpack.c.b16 %v761, %v760
    %778 = vmatprep.subr.bf16.mxu0 0
    %779 = vmatpush1.bf16.msra.mxu0 %v762
    %780 = vmatprep.subr.bf16.mxu0 0
    %781 = vmatpush1.bf16.msra.mxu0 %v763
    %782 = vmatprep.subr.bf16.mxu0 0
    %783 = vmatpush1.bf16.msra.mxu0 %v764
    %784 = vmatprep.subr.bf16.mxu0 0
    %785 = vmatpush1.bf16.msra.mxu0 %v765
    %786 = vmatprep.subr.bf16.mxu0 0
    %787 = vmatpush1.bf16.msra.mxu0 %v766
    %788 = vmatprep.subr.bf16.mxu0 0
    %789 = vmatpush1.bf16.msra.mxu0 %v767
    %790 = vmatprep.subr.bf16.mxu0 0
    %791 = vmatpush1.bf16.msra.mxu0 %v768
    %792 = vmatprep.subr.bf16.mxu0 0
    %793 = vmatpush1.bf16.msra.mxu0 %v769
    %794 = vmatprep.subr.bf16.mxu0 0
    %795 = vmatpush1.bf16.msra.mxu0 0
    %796 = vmatprep.subr.bf16.mxu0 0
    %797 = vmatpush1.bf16.msra.mxu0 0
    %798 = vmatprep.subr.bf16.mxu0 0
    %799 = vmatpush1.bf16.msra.mxu0 0
    %800 = vmatprep.subr.bf16.mxu0 0
    %801 = vmatpush1.bf16.msra.mxu0 0
    %802 = vmatprep.subr.bf16.mxu0 0
    %803 = vmatpush1.bf16.msra.mxu0 0
    %804 = vmatprep.subr.bf16.mxu0 0
    %805 = vmatpush1.bf16.msra.mxu0 0
    %806 = vmatprep.subr.bf16.mxu0 0
    %807 = vmatpush1.bf16.msra.mxu0 0
    %808 = vmatprep.subr.bf16.mxu0 0
    %809 = vmatpush1.bf16.msra.mxu0 0
    %810 = vmatprep.mubr.bf16.mxu0 0
    %811 = vmatmul.mubr.bf16.gmra.mrb[0].mxu0 %v728
    %v812 = vpop.f32.mrb[0].mxu0
    %v813 = vadd.f32 %v712, %v812
    %v814 = vpop.f32.mrb[0].mxu0
    %v815 = vpop.f32.mrb[0].mxu0
    %v816 = vpop.f32.mrb[0].mxu0
    %817 = vdwg.mxu0
    %v818 = vmax.f32 %v813, 0.0
    %v819 = vpack.c.bf16 %v818, %v818
    %v821 = vrot.slane %v819, 1
    %v823 = vld [vmem:[%s6] sm:$0xf]
    %v824 = vld [vmem:[%s6 + $0x4] sm:$0xf]
    %v825 = vld [vmem:[%s6 + $0x8] sm:$0xf]
    %v826 = vld [vmem:[%s6 + $0xc] sm:$0xf]
    %v827 = vld [vmem:[%s6 + $0x10] sm:$0xf]
    %v828 = vld [vmem:[%s6 + $0x14] sm:$0xf]
    %v829 = vld [vmem:[%s6 + $0x18] sm:$0xf]
    %v830 = vld [vmem:[%s6 + $0x1c] sm:$0xf]
    %v831 = vld [vmem:[%s6 + $0x20] sm:$0xf]
    %v832 = vld [vmem:[%s6 + $0x24] sm:$0xf]
    %v833 = vld [vmem:[%s6 + $0x28] sm:$0xf]
    %v834 = vld [vmem:[%s6 + $0x2c] sm:$0xf]
    %v835 = vld [vmem:[%s6 + $0x30] sm:$0xf]
    %v836 = vld [vmem:[%s6 + $0x34] sm:$0xf]
    %v837 = vld [vmem:[%s6 + $0x38] sm:$0xf]
    %v838 = vld [vmem:[%s6 + $0x3c] sm:$0xf]
    %v839 = vld [vmem:[%s6 + $0x40] sm:$0xf]
    %v840 = vld [vmem:[%s6 + $0x44] sm:$0xf]
    %v841 = vld [vmem:[%s6 + $0x48] sm:$0xf]
    %v842 = vld [vmem:[%s6 + $0x4c] sm:$0xf]
    %v843 = vld [vmem:[%s6 + $0x50] sm:$0xf]
    %v844 = vld [vmem:[%s6 + $0x54] sm:$0xf]
    %v845 = vld [vmem:[%s6 + $0x58] sm:$0xf]
    %v846 = vld [vmem:[%s6 + $0x5c] sm:$0xf]
    %v847 = vld [vmem:[%s6 + $0x60] sm:$0xf]
    %v848 = vld [vmem:[%s6 + $0x64] sm:$0xf]
    %v849 = vld [vmem:[%s6 + $0x68] sm:$0xf]
    %v850 = vld [vmem:[%s6 + $0x6c] sm:$0xf]
    %v851 = vld [vmem:[%s6 + $0x70] sm:$0xf]
    %v852 = vld [vmem:[%s6 + $0x74] sm:$0xf]
    %v853 = vld [vmem:[%s6 + $0x78] sm:$0xf]
    %v854 = vld [vmem:[%s6 + $0x7c] sm:$0xf]
    %v855 = vld [vmem:[%s7] sm:$0x1]
    %v857 = vlaneseq
    %v858 = vshrl.u32 %v857, 7
    %v859 = vsub.s32 0, %v858
    %v860 = vrot.slane %v855, %v859
    %v894 = vunpack.c.l.b16 %v823
    %v895 = vunpack.c.l.b16 %v824
    %v896 = vunpack.c.l.b16 %v825
    %v897 = vunpack.c.l.b16 %v826
    %v898 = vunpack.c.l.b16 %v827
    %v899 = vunpack.c.l.b16 %v828
    %v900 = vunpack.c.l.b16 %v829
    %v901 = vunpack.c.l.b16 %v830
    %v902 = vunpack.c.l.b16 %v831
    %v903 = vunpack.c.l.b16 %v832
    %v904 = vunpack.c.l.b16 %v833
    %v905 = vunpack.c.l.b16 %v834
    %v906 = vunpack.c.l.b16 %v835
    %v907 = vunpack.c.l.b16 %v836
    %v908 = vunpack.c.l.b16 %v837
    %v909 = vunpack.c.l.b16 %v838
    %v910 = vunpack.c.l.b16 %v839
    %v911 = vunpack.c.l.b16 %v840
    %v912 = vunpack.c.l.b16 %v841
    %v913 = vunpack.c.l.b16 %v842
    %v914 = vunpack.c.l.b16 %v843
    %v915 = vunpack.c.l.b16 %v844
    %v916 = vunpack.c.l.b16 %v845
    %v917 = vunpack.c.l.b16 %v846
    %v918 = vunpack.c.l.b16 %v847
    %v919 = vunpack.c.l.b16 %v848
    %v920 = vunpack.c.l.b16 %v849
    %v921 = vunpack.c.l.b16 %v850
    %v922 = vunpack.c.l.b16 %v851
    %v923 = vunpack.c.l.b16 %v852
    %v924 = vunpack.c.l.b16 %v853
    %v925 = vunpack.c.l.b16 %v854
    %v926 = vpack.c.b16 %v895, %v894
    %v927 = vpack.c.b16 %v897, %v896
    %v928 = vpack.c.b16 %v899, %v898
    %v929 = vpack.c.b16 %v901, %v900
    %v930 = vpack.c.b16 %v903, %v902
    %v931 = vpack.c.b16 %v905, %v904
    %v932 = vpack.c.b16 %v907, %v906
    %v933 = vpack.c.b16 %v909, %v908
    %v934 = vpack.c.b16 %v911, %v910
    %v935 = vpack.c.b16 %v913, %v912
    %v936 = vpack.c.b16 %v915, %v914
    %v937 = vpack.c.b16 %v917, %v916
    %v938 = vpack.c.b16 %v919, %v918
    %v939 = vpack.c.b16 %v921, %v920
    %v940 = vpack.c.b16 %v923, %v922
    %v941 = vpack.c.b16 %v925, %v924
    %958 = vmatprep.subr.bf16.mxu0 0
    %959 = vmatpush1.bf16.msra.mxu0 %v926
    %960 = vmatprep.subr.bf16.mxu0 0
    %961 = vmatpush1.bf16.msra.mxu0 %v927
    %962 = vmatprep.subr.bf16.mxu0 0
    %963 = vmatpush1.bf16.msra.mxu0 %v928
    %964 = vmatprep.subr.bf16.mxu0 0
    %965 = vmatpush1.bf16.msra.mxu0 %v929
    %966 = vmatprep.subr.bf16.mxu0 0
    %967 = vmatpush1.bf16.msra.mxu0 %v930
    %968 = vmatprep.subr.bf16.mxu0 0
    %969 = vmatpush1.bf16.msra.mxu0 %v931
    %970 = vmatprep.subr.bf16.mxu0 0
    %971 = vmatpush1.bf16.msra.mxu0 %v932
    %972 = vmatprep.subr.bf16.mxu0 0
    %973 = vmatpush1.bf16.msra.mxu0 %v933
    %974 = vmatprep.subr.bf16.mxu0 0
    %975 = vmatpush1.bf16.msra.mxu0 %v934
    %976 = vmatprep.subr.bf16.mxu0 0
    %977 = vmatpush1.bf16.msra.mxu0 %v935
    %978 = vmatprep.subr.bf16.mxu0 0
    %979 = vmatpush1.bf16.msra.mxu0 %v936
    %980 = vmatprep.subr.bf16.mxu0 0
    %981 = vmatpush1.bf16.msra.mxu0 %v937
    %982 = vmatprep.subr.bf16.mxu0 0
    %983 = vmatpush1.bf16.msra.mxu0 %v938
    %984 = vmatprep.subr.bf16.mxu0 0
    %985 = vmatpush1.bf16.msra.mxu0 %v939
    %986 = vmatprep.subr.bf16.mxu0 0
    %987 = vmatpush1.bf16.msra.mxu0 %v940
    %988 = vmatprep.subr.bf16.mxu0 0
    %989 = vmatpush1.bf16.msra.mxu0 %v941
    %990 = vmatprep.mubr.bf16.mxu0 %v821
    %991 = vmatmul.mubr.bf16.gmra.mrb[0].mxu0 %v819
    %v992 = vpop.f32.mrb[0].mxu0
    %v993 = vadd.f32 %v860, %v992
    %v994 = vpop.f32.mrb[0].mxu0
    %v995 = vpop.f32.mrb[0].mxu0
    %v996 = vpop.f32.mrb[0].mxu0
    %997 = vdwg.mxu0
    %v998 = vmax.f32 %v993, 0.0
    %v999 = vpack.c.bf16 %v998, %v998
    %v1000 = vld [vmem:[%s8] sm:$0xf]
    %v1001 = vld [vmem:[%s8 + $0x4] sm:$0xf]
    %v1002 = vld [vmem:[%s8 + $0x8] sm:$0xf]
    %v1003 = vld [vmem:[%s8 + $0xc] sm:$0xf]
    %v1004 = vld [vmem:[%s8 + $0x10] sm:$0xf]
    %v1005 = vld [vmem:[%s8 + $0x14] sm:$0xf]
    %v1006 = vld [vmem:[%s8 + $0x18] sm:$0xf]
    %v1007 = vld [vmem:[%s8 + $0x1c] sm:$0xf]
    %v1008 = vld [vmem:[%s8 + $0x20] sm:$0xf]
    %v1009 = vld [vmem:[%s8 + $0x24] sm:$0xf]
    %v1010 = vld [vmem:[%s8 + $0x28] sm:$0xf]
    %v1011 = vld [vmem:[%s8 + $0x2c] sm:$0xf]
    %v1012 = vld [vmem:[%s8 + $0x30] sm:$0xf]
    %v1013 = vld [vmem:[%s8 + $0x34] sm:$0xf]
    %v1014 = vld [vmem:[%s8 + $0x38] sm:$0xf]
    %v1015 = vld [vmem:[%s8 + $0x3c] sm:$0xf]
    %v1016 = vld [vmem:[%s9] sm:$0x1]
    %v1018 = vlaneseq
    %v1019 = vshrl.u32 %v1018, 7
    %v1020 = vsub.s32 0, %v1019
    %v1021 = vrot.slane %v1016, %v1020
    %v1039 = vunpack.c.l.b16 %v1000
    %v1040 = vunpack.c.l.b16 %v1001
    %v1041 = vunpack.c.l.b16 %v1002
    %v1042 = vunpack.c.l.b16 %v1003
    %v1043 = vunpack.c.l.b16 %v1004
    %v1044 = vunpack.c.l.b16 %v1005
    %v1045 = vunpack.c.l.b16 %v1006
    %v1046 = vunpack.c.l.b16 %v1007
    %v1047 = vunpack.c.l.b16 %v1008
    %v1048 = vunpack.c.l.b16 %v1009
    %v1049 = vunpack.c.l.b16 %v1010
    %v1050 = vunpack.c.l.b16 %v1011
    %v1051 = vunpack.c.l.b16 %v1012
    %v1052 = vunpack.c.l.b16 %v1013
    %v1053 = vunpack.c.l.b16 %v1014
    %v1054 = vunpack.c.l.b16 %v1015
    %v1055 = vpack.c.b16 %v1040, %v1039
    %v1056 = vpack.c.b16 %v1042, %v1041
    %v1057 = vpack.c.b16 %v1044, %v1043
    %v1058 = vpack.c.b16 %v1046, %v1045
    %v1059 = vpack.c.b16 %v1048, %v1047
    %v1060 = vpack.c.b16 %v1050, %v1049
    %v1061 = vpack.c.b16 %v1052, %v1051
    %v1062 = vpack.c.b16 %v1054, %v1053
    %1071 = vmatprep.subr.bf16.mxu0 0
    %1072 = vmatpush1.bf16.msra.mxu0 %v1055
    %1073 = vmatprep.subr.bf16.mxu0 0
    %1074 = vmatpush1.bf16.msra.mxu0 %v1056
    %1075 = vmatprep.subr.bf16.mxu0 0
    %1076 = vmatpush1.bf16.msra.mxu0 %v1057
    %1077 = vmatprep.subr.bf16.mxu0 0
    %1078 = vmatpush1.bf16.msra.mxu0 %v1058
    %1079 = vmatprep.subr.bf16.mxu0 0
    %1080 = vmatpush1.bf16.msra.mxu0 %v1059
    %1081 = vmatprep.subr.bf16.mxu0 0
    %1082 = vmatpush1.bf16.msra.mxu0 %v1060
    %1083 = vmatprep.subr.bf16.mxu0 0
    %1084 = vmatpush1.bf16.msra.mxu0 %v1061
    %1085 = vmatprep.subr.bf16.mxu0 0
    %1086 = vmatpush1.bf16.msra.mxu0 %v1062
    %1087 = vmatprep.subr.bf16.mxu0 0
    %1088 = vmatpush1.bf16.msra.mxu0 0
    %1089 = vmatprep.subr.bf16.mxu0 0
    %1090 = vmatpush1.bf16.msra.mxu0 0
    %1091 = vmatprep.subr.bf16.mxu0 0
    %1092 = vmatpush1.bf16.msra.mxu0 0
    %1093 = vmatprep.subr.bf16.mxu0 0
    %1094 = vmatpush1.bf16.msra.mxu0 0
    %1095 = vmatprep.subr.bf16.mxu0 0
    %1096 = vmatpush1.bf16.msra.mxu0 0
    %1097 = vmatprep.subr.bf16.mxu0 0
    %1098 = vmatpush1.bf16.msra.mxu0 0
    %1099 = vmatprep.subr.bf16.mxu0 0
    %1100 = vmatpush1.bf16.msra.mxu0 0
    %1101 = vmatprep.subr.bf16.mxu0 0
    %1102 = vmatpush1.bf16.msra.mxu0 0
    %1103 = vmatprep.mubr.bf16.mxu0 0
    %1104 = vmatmul.mubr.bf16.gmra.mrb[0].mxu0 %v999
    %v1105 = vpop.f32.mrb[0].mxu0
    %v1106 = vadd.f32 %v1021, %v1105
    %v1107 = vpop.f32.mrb[0].mxu0
    %v1108 = vpop.f32.mrb[0].mxu0
    %v1109 = vpop.f32.mrb[0].mxu0
    %1110 = vdwg.mxu0
    %1111 = vst [vmem:[#allocation2] sm:$0x3] %v1106
    // Predicated region
    $region42: #{rnetwork_forward.1} parent=1 // pred_check
      _
    $region43: #{rnetwork_forward.1} parent=1 // pred_check_branch
      %1113 = sbr.rel (0) target = $region45
    $region44: #{rnetwork_forward.1} parent=1 // pred_region
      %s1115 = ssub.s32 32, 32
      %1116 = vsyncadd [#allocation3], %s1115
      %s1118 = sshll.u32 [#allocation2], 4
      %s1119 = int_to_ptr.vmem [resolvable:$true] %s1118
      %1121 = dma.vmem_to_hbm [thread:$0]  %s1119, 32, %s10, [#allocation3]
    $region45: #{rnetwork_forward.1} parent=1 // pred_fallthru
      _
    // Predicated region
    $region46: #{rnetwork_forward.1} parent=1 // pred_check
      _
    $region47: #{rnetwork_forward.1} parent=1 // pred_check_branch
      %1123 = sbr.rel (0) target = $region49
    $region48: #{rnetwork_forward.1} parent=1 // pred_region
      %1124 = dma.done [#allocation3], 32
    $region49: #{rnetwork_forward.1} parent=1 // pred_fallthru
      _
    %1125 = vsyncpa [#allocation3], 1

</llo_original>
